<compile_context>
chip_gen: v6e
topology: v6e:2x2x1
jax: 0.10.0
libtpu: 0.0.40
codegen_flags: <defaults>
</compile_context>

<pallas_src>
import functools

import jax
import jax.numpy as jnp
from jax.experimental import pallas as pl
from jax.experimental.pallas import tpu as pltpu

BN_EPS = 1e-5
_LANE = 128
_SUBLANE = 8
_MAX_TILE_LANES = 32768          # >= 32768 lanes per grid step (perf review)
_STEP_TARGET_BYTES = 4 << 20     # ~4 MiB of x per grid step
_FUSED_VMEM_BUDGET = 12 << 20    # x + out resident in VMEM -> single fused kernel
_VMEM_LIMIT = 48 << 20           # safe on v7x (64 MiB phys) and v5e/v6e (128 MiB)


def _round_up(x, m):
    return ((x + m - 1) // m) * m


def _choose_spatial_tile(hw):
    """Lane tile: full extent when tiny, else a multiple of 128, up to 32K lanes."""
    if hw <= _LANE:
        return hw
    return min(_round_up(hw, _LANE), _MAX_TILE_LANES)


def _choose_row_block(rows, tile_lanes, itemsize):
    """Rows per stats step: ~_STEP_TARGET_BYTES of x, multiple of 8 (or all rows)."""
    rb = max(1, _STEP_TARGET_BYTES // (tile_lanes * itemsize))
    if rb >= rows:
        return rows
    return max(_SUBLANE, (rb // _SUBLANE) * _SUBLANE)


# ----------------------------------------------------------------------------
# Fused path: whole activation is VMEM-resident; stats + fold + conv in one go.
# ----------------------------------------------------------------------------
def _fused_kernel(x_ref, g_ref, bt_ref, w_ref, cb_ref, o_ref):
    n, c_in, hw = x_ref.shape
    inv_count = 1.0 / float(n * hw)

    # Per-channel batch statistics from the VMEM-resident activation.
    def stats_body(b, carry):
        s, sq = carry
        xb = x_ref[b].astype(jnp.float32)                    # (c_in, hw)
        return (s + jnp.sum(xb, axis=-1, keepdims=True),
                sq + jnp.sum(xb * xb, axis=-1, keepdims=True))

    zeros = jnp.zeros((c_in, 1), jnp.float32)
    s, sq = jax.lax.fori_loop(0, n, stats_body, (zeros, zeros), unroll=n <= 8)

    mean = s * inv_count                                     # (c_in, 1)
    var = jnp.maximum(sq * inv_count - mean * mean, 0.0)     # clamp: no NaN in rsqrt
    inv_std = jax.lax.rsqrt(var + BN_EPS)
    scale = g_ref[...] * inv_std                             # (c_in, 1)
    shift = bt_ref[...] - mean * scale                       # (c_in, 1)
    w = w_ref[...]                                           # (c_out, c_in) f32
    bias = cb_ref[...]                                       # (c_out, 1)  f32

    # BN + folded 1x1 conv, per batch item (x stays on-chip, read once from HBM).
    def conv_body(b, carry):
        xb = x_ref[b].astype(jnp.float32)                    # (c_in, hw)
        yb = xb * scale + shift                              # BatchNorm
        ob = jnp.dot(w, yb, preferred_element_type=jnp.float32) + bias
        o_ref[b] = ob.astype(o_ref.dtype)
        return carry

    jax.lax.fori_loop(0, n, conv_body, 0, unroll=n <= 8)


# ----------------------------------------------------------------------------
# Tiled path, pass 1: per-row partial sums over a (rows, spatial) grid.
# ----------------------------------------------------------------------------
def _stats_kernel(hw, tile_s, needs_mask, x_ref, sum_ref, sumsq_ref):
    s_idx = pl.program_id(1)

    @pl.when(s_idx == 0)
    def _():
        sum_ref[...] = jnp.zeros_like(sum_ref)
        sumsq_ref[...] = jnp.zeros_like(sumsq_ref)

    x = x_ref[...].astype(jnp.float32)                       # (row_block, tile_s)
    if needs_mask:                                           # ragged spatial tail
        col = jax.lax.broadcasted_iota(jnp.int32, x.shape, 1) + s_idx * tile_s
        x = jnp.where(col < hw, x, 0.0)
    sum_ref[...] += jnp.sum(x, axis=-1, keepdims=True)
    sumsq_ref[...] += jnp.sum(x * x, axis=-1, keepdims=True)


# ----------------------------------------------------------------------------
# Tiled path, pass 2: out = W' @ x + b' with BN folded into (W', b').
# ----------------------------------------------------------------------------
def _folded_conv_kernel(x_ref, w_ref, b_ref, o_ref):
    w = w_ref[...]                                           # (c_out, c_in) f32
    bias = b_ref[...]                                        # (c_out, 1)  f32
    n_b = x_ref.shape[0]

    # TODO(synk): on v5e an unrolled VPU broadcast-FMA over c_in would avoid the
    # MXU K-padding; kept as a single dot since the kernel is HBM-bound.
    def body(b, carry):
        xb = x_ref[b].astype(jnp.float32)                    # (c_in, tile)
        ob = jnp.dot(w, xb, preferred_element_type=jnp.float32) + bias
        o_ref[b] = ob.astype(o_ref.dtype)
        return carry

    jax.lax.fori_loop(0, n_b, body, 0, unroll=n_b <= 8)


def squeeze_block(x_nchw, gamma, beta, conv_w, conv_b, *, force_tiled=False):
    """BatchNorm2d (training-mode batch stats) -> Conv2d 1x1.

    x_nchw: (N, C_in, H, W); conv_w: (C_out, C_in, 1, 1). Returns (N, C_out, H, W).
    """
    n, c_in, h, w = x_nchw.shape
    c_out = conv_w.shape[0]
    hw = h * w
    out_dtype = x_nchw.dtype
    x_item = x_nchw.dtype.itemsize
    out_item = jnp.dtype(out_dtype).itemsize

    gamma2 = gamma.reshape(c_in, 1).astype(jnp.float32)
    beta2 = beta.reshape(c_in, 1).astype(jnp.float32)
    w2 = conv_w.reshape(c_out, c_in).astype(jnp.float32)
    cb2 = conv_b.reshape(c_out, 1).astype(jnp.float32)

    x_bytes = n * c_in * hw * x_item
    out_bytes = n * c_out * hw * out_item

    # ---- fused path: x + out fit in VMEM -> single kernel, one HBM read of x --
    if not force_tiled and (x_bytes + out_bytes) <= _FUSED_VMEM_BUDGET:
        x3 = x_nchw.reshape(n, c_in, hw)            # contiguous collapse, no copy
        out3 = pl.pallas_call(
            _fused_kernel,
            out_shape=jax.ShapeDtypeStruct((n, c_out, hw), out_dtype),
            grid=(1,),
            in_specs=[pl.BlockSpec((n, c_in, hw), lambda i: (0, 0, 0)),
                      pl.BlockSpec((c_in, 1), lambda i: (0, 0)),
                      pl.BlockSpec((c_in, 1), lambda i: (0, 0)),
                      pl.BlockSpec((c_out, c_in), lambda i: (0, 0)),
                      pl.BlockSpec((c_out, 1), lambda i: (0, 0))],
            out_specs=pl.BlockSpec((n, c_out, hw), lambda i: (0, 0, 0)),
            compiler_params=pltpu.CompilerParams(
                dimension_semantics=("arbitrary",),
                vmem_limit_bytes=_VMEM_LIMIT),
        )(x3, gamma2, beta2, w2, cb2)
        return out3.reshape(n, c_out, h, w)

    # ---- tiled path, pass 1: per-row partial sums -----------------------------
    # 2D view (n*c_in, hw): full sublane occupancy; rows are 'parallel'.
    x2 = x_nchw.reshape(n * c_in, hw)               # contiguous collapse, no copy
    rows = n * c_in
    tile_s = _choose_spatial_tile(hw)
    needs_mask = (hw % tile_s) != 0
    row_block = _choose_row_block(rows, tile_s, x_item)
    grid1 = (pl.cdiv(rows, row_block), pl.cdiv(hw, tile_s))

    sums, sumsqs = pl.pallas_call(
        functools.partial(_stats_kernel, hw, tile_s, needs_mask),
        out_shape=(jax.ShapeDtypeStruct((rows, 1), jnp.float32),
                   jax.ShapeDtypeStruct((rows, 1), jnp.float32)),
        grid=grid1,
        in_specs=[pl.BlockSpec((row_block, tile_s), lambda r, s: (r, s))],
        out_specs=(pl.BlockSpec((row_block, 1), lambda r, s: (r, 0)),
                   pl.BlockSpec((row_block, 1), lambda r, s: (r, 0))),
        compiler_params=pltpu.CompilerParams(
            dimension_semantics=("parallel", "arbitrary"),
            vmem_limit_bytes=_VMEM_LIMIT),
    )(x2)

    # Tiny wrapper-side reduction over batch + BN fold into the 1x1 conv.
    sums_c = sums.reshape(n, c_in).sum(axis=0)
    sumsqs_c = sumsqs.reshape(n, c_in).sum(axis=0)
    count = jnp.float32(n * hw)
    mean = sums_c / count
    var = jnp.maximum(sumsqs_c / count - mean * mean, 0.0)
    inv_std = jax.lax.rsqrt(var + BN_EPS)
    scale = gamma2[:, 0] * inv_std                            # (c_in,)
    shift = beta2[:, 0] - mean * scale                        # (c_in,)
    w_fold = w2 * scale[None, :]                              # (c_out, c_in)
    b_fold = cb2 + (w2 @ shift).reshape(c_out, 1)             # (c_out, 1)

    # ---- tiled path, pass 2: folded conv, fully parallel grid -----------------
    x3 = x_nchw.reshape(n, c_in, hw)
    per_item = tile_s * (c_in * x_item + c_out * out_item)
    n_b = int(max(1, min(n, _STEP_TARGET_BYTES // per_item)))
    grid2 = (pl.cdiv(n, n_b), pl.cdiv(hw, tile_s))

    out3 = pl.pallas_call(
        _folded_conv_kernel,
        out_shape=jax.ShapeDtypeStruct((n, c_out, hw), out_dtype),
        grid=grid2,
        in_specs=[pl.BlockSpec((n_b, c_in, tile_s), lambda b, s: (b, 0, s)),
                  pl.BlockSpec((c_out, c_in), lambda b, s: (0, 0)),
                  pl.BlockSpec((c_out, 1), lambda b, s: (0, 0))],
        out_specs=pl.BlockSpec((n_b, c_out, tile_s), lambda b, s: (b, 0, s)),
        compiler_params=pltpu.CompilerParams(
            dimension_semantics=("parallel", "parallel"),
            vmem_limit_bytes=_VMEM_LIMIT),
    )(x3, w_fold, b_fold)

    return out3.reshape(n, c_out, h, w)


if __name__ == "__main__":
    key = jax.random.PRNGKey(0)
    k_x, k_g, k_b, k_w, k_cb = jax.random.split(key, 5)

    N, C_IN, C_OUT, H, W = 2, 4, 8, 16, 16

    x = jax.random.normal(k_x, (N, C_IN, H, W), dtype=jnp.float32)
    gamma = 1.0 + 0.1 * jax.random.normal(k_g, (C_IN,), dtype=jnp.float32)   # BN weight
    beta = 0.1 * jax.random.normal(k_b, (C_IN,), dtype=jnp.float32)          # BN bias
    conv_w = 0.1 * jax.random.normal(k_w, (C_OUT, C_IN, 1, 1), dtype=jnp.float32)
    conv_b = 0.05 * jax.random.normal(k_cb, (C_OUT,), dtype=jnp.float32)

    # Pure-JAX reference: training-mode BN (biased batch variance) then 1x1 conv.
    mean = jnp.mean(x, axis=(0, 2, 3), keepdims=True)
    var = jnp.var(x, axis=(0, 2, 3), keepdims=True)
    y = (x - mean) * jax.lax.rsqrt(var + BN_EPS)
    y = y * gamma.reshape(1, -1, 1, 1) + beta.reshape(1, -1, 1, 1)
    ref = jnp.einsum("nchw,oc->nohw", y, conv_w.reshape(C_OUT, C_IN))
    ref = ref + conv_b.reshape(1, -1, 1, 1)

    # Fused (VMEM-resident) path — the one this shape takes by default.
    out = squeeze_block(x, gamma, beta, conv_w, conv_b)
    jax.block_until_ready(out)
    assert out.shape == (N, C_OUT, H, W), out.shape
    err = float(jnp.max(jnp.abs(out - ref)))
    assert jnp.allclose(out, ref, rtol=1e-4, atol=1e-4), err

    # Tiled two-pass path (used for activations too large for VMEM residency).
    out_t = squeeze_block(x, gamma, beta, conv_w, conv_b, force_tiled=True)
    jax.block_until_ready(out_t)
    err_t = float(jnp.max(jnp.abs(out_t - ref)))
    assert jnp.allclose(out_t, ref, rtol=1e-4, atol=1e-4), err_t

    print("KERNEL_OK")
</pallas_src>

<mosaic_0001>
module attributes {stable_mosaic.version = 11 : i64} {
  func.func @_fused_kernel(%arg0: i32, %arg1: memref<2x4x256xf32, #tpu.memory_space<vmem>>, %arg2: memref<4x1xf32, #tpu.memory_space<vmem>>, %arg3: memref<4x1xf32, #tpu.memory_space<vmem>>, %arg4: memref<8x4xf32, #tpu.memory_space<vmem>>, %arg5: memref<8x1xf32, #tpu.memory_space<vmem>>, %arg6: memref<2x8x256xf32, #tpu.memory_space<vmem>>) attributes {dimension_semantics = [#tpu.dimension_semantics<arbitrary>], iteration_bounds = array<i64: 1>, scalar_prefetch = 0 : i64, scratch_operands = 0 : i64, tpu.core_type = #tpu.core_type<tc>, window_params = [{pipeline_mode = #tpu.pipeline_mode<synchronous>, transform_indices = @transform_0, window_bounds = array<i64: 2, 4, 256>}, {pipeline_mode = #tpu.pipeline_mode<synchronous>, transform_indices = @transform_1, window_bounds = array<i64: 4, 1>}, {pipeline_mode = #tpu.pipeline_mode<synchronous>, transform_indices = @transform_2, window_bounds = array<i64: 4, 1>}, {pipeline_mode = #tpu.pipeline_mode<synchronous>, transform_indices = @transform_3, window_bounds = array<i64: 8, 4>}, {pipeline_mode = #tpu.pipeline_mode<synchronous>, transform_indices = @transform_4, window_bounds = array<i64: 8, 1>}, {pipeline_mode = #tpu.pipeline_mode<synchronous>, transform_indices = @transform_5, window_bounds = array<i64: 2, 8, 256>}]} {
    %cst = arith.constant 0.000000e+00 : f32
    %0 = vector.broadcast %cst : f32 to vector<4x1xf32>
    %c0_i32 = arith.constant 0 : i32
    %1 = arith.index_cast %c0_i32 : i32 to index
    %c0 = arith.constant 0 : index
    %c0_0 = arith.constant 0 : index
    %2 = vector.load %arg1[%1, %c0, %c0_0] : memref<2x4x256xf32, #tpu.memory_space<vmem>>, vector<1x4x256xf32>
    %3 = vector.shape_cast %2 : vector<1x4x256xf32> to vector<4x256xf32>
    %cst_1 = arith.constant dense<0.000000e+00> : vector<4xf32>
    %4 = vector.multi_reduction <add>, %3, %cst_1 [1] : vector<4x256xf32> to vector<4xf32>
    %5 = vector.shape_cast %4 : vector<4xf32> to vector<4x1xf32>
    %6 = arith.addf %0, %5 : vector<4x1xf32>
    %7 = arith.mulf %3, %3 : vector<4x256xf32>
    %cst_2 = arith.constant dense<0.000000e+00> : vector<4xf32>
    %8 = vector.multi_reduction <add>, %7, %cst_2 [1] : vector<4x256xf32> to vector<4xf32>
    %9 = vector.shape_cast %8 : vector<4xf32> to vector<4x1xf32>
    %10 = arith.addf %0, %9 : vector<4x1xf32>
    %c1_i32 = arith.constant 1 : i32
    %11 = arith.index_cast %c1_i32 : i32 to index
    %c0_3 = arith.constant 0 : index
    %c0_4 = arith.constant 0 : index
    %12 = vector.load %arg1[%11, %c0_3, %c0_4] : memref<2x4x256xf32, #tpu.memory_space<vmem>>, vector<1x4x256xf32>
    %13 = vector.shape_cast %12 : vector<1x4x256xf32> to vector<4x256xf32>
    %cst_5 = arith.constant dense<0.000000e+00> : vector<4xf32>
    %14 = vector.multi_reduction <add>, %13, %cst_5 [1] : vector<4x256xf32> to vector<4xf32>
    %15 = vector.shape_cast %14 : vector<4xf32> to vector<4x1xf32>
    %16 = arith.addf %6, %15 : vector<4x1xf32>
    %17 = arith.mulf %13, %13 : vector<4x256xf32>
    %cst_6 = arith.constant dense<0.000000e+00> : vector<4xf32>
    %18 = vector.multi_reduction <add>, %17, %cst_6 [1] : vector<4x256xf32> to vector<4xf32>
    %19 = vector.shape_cast %18 : vector<4xf32> to vector<4x1xf32>
    %20 = arith.addf %10, %19 : vector<4x1xf32>
    %c2_i32 = arith.constant 2 : i32
    %cst_7 = arith.constant 0.001953125 : f32
    %21 = vector.broadcast %cst_7 : f32 to vector<4x1xf32>
    %22 = arith.mulf %16, %21 : vector<4x1xf32>
    %cst_8 = arith.constant 0.001953125 : f32
    %23 = vector.broadcast %cst_8 : f32 to vector<4x1xf32>
    %24 = arith.mulf %20, %23 : vector<4x1xf32>
    %25 = arith.mulf %22, %22 : vector<4x1xf32>
    %26 = arith.subf %24, %25 : vector<4x1xf32>
    %cst_9 = arith.constant 0.000000e+00 : f32
    %27 = vector.broadcast %cst_9 : f32 to vector<4x1xf32>
    %28 = arith.maximumf %26, %27 : vector<4x1xf32>
    %cst_10 = arith.constant 9.99999974E-6 : f32
    %29 = vector.broadcast %cst_10 : f32 to vector<4x1xf32>
    %30 = arith.addf %28, %29 : vector<4x1xf32>
    %31 = math.rsqrt %30 : vector<4x1xf32>
    %c0_11 = arith.constant 0 : index
    %c0_12 = arith.constant 0 : index
    %32 = vector.load %arg2[%c0_11, %c0_12] : memref<4x1xf32, #tpu.memory_space<vmem>>, vector<4x1xf32>
    %33 = arith.mulf %32, %31 : vector<4x1xf32>
    %c0_13 = arith.constant 0 : index
    %c0_14 = arith.constant 0 : index
    %34 = vector.load %arg3[%c0_13, %c0_14] : memref<4x1xf32, #tpu.memory_space<vmem>>, vector<4x1xf32>
    %35 = arith.mulf %22, %33 : vector<4x1xf32>
    %36 = arith.subf %34, %35 : vector<4x1xf32>
    %c0_15 = arith.constant 0 : index
    %c0_16 = arith.constant 0 : index
    %37 = vector.load %arg4[%c0_15, %c0_16] : memref<8x4xf32, #tpu.memory_space<vmem>>, vector<8x4xf32>
    %c0_17 = arith.constant 0 : index
    %c0_18 = arith.constant 0 : index
    %38 = vector.load %arg5[%c0_17, %c0_18] : memref<8x1xf32, #tpu.memory_space<vmem>>, vector<8x1xf32>
    %c0_i32_19 = arith.constant 0 : i32
    %39 = arith.index_cast %c0_i32_19 : i32 to index
    %c0_20 = arith.constant 0 : index
    %c0_21 = arith.constant 0 : index
    %40 = vector.load %arg1[%39, %c0_20, %c0_21] : memref<2x4x256xf32, #tpu.memory_space<vmem>>, vector<1x4x256xf32>
    %41 = vector.shape_cast %40 : vector<1x4x256xf32> to vector<4x256xf32>
    %42 = vector.broadcast %33 : vector<4x1xf32> to vector<4x256xf32>
    %43 = arith.mulf %41, %42 : vector<4x256xf32>
    %44 = vector.broadcast %36 : vector<4x1xf32> to vector<4x256xf32>
    %45 = arith.addf %43, %44 : vector<4x256xf32>
    %cst_22 = arith.constant dense<0.000000e+00> : vector<8x256xf32>
    %46 = tpu.matmul %37, %45, %cst_22 {dimension_numbers = #tpu.dot_dimension_numbers<[1], [0], [0], [1], [0, 0, 1, 1], [], []>} : vector<8x4xf32>, vector<4x256xf32>, vector<8x256xf32> -> vector<8x256xf32>
    %47 = vector.broadcast %38 : vector<8x1xf32> to vector<8x256xf32>
    %48 = arith.addf %46, %47 : vector<8x256xf32>
    %49 = arith.index_cast %c0_i32_19 : i32 to index
    %c0_23 = arith.constant 0 : index
    %c0_24 = arith.constant 0 : index
    %50 = vector.load %arg6[%49, %c0_23, %c0_24] : memref<2x8x256xf32, #tpu.memory_space<vmem>>, vector<1x8x256xf32>
    %51 = vector.shape_cast %50 : vector<1x8x256xf32> to vector<8x256xf32>
    %52 = vector.shape_cast %48 : vector<8x256xf32> to vector<1x8x256xf32>
    tpu.vector_store %arg6[%49, %c0_23, %c0_24], %52 {strides = array<i32>} : memref<2x8x256xf32, #tpu.memory_space<vmem>>, vector<1x8x256xf32>,
    %c1_i32_25 = arith.constant 1 : i32
    %53 = arith.index_cast %c1_i32_25 : i32 to index
    %c0_26 = arith.constant 0 : index
    %c0_27 = arith.constant 0 : index
    %54 = vector.load %arg1[%53, %c0_26, %c0_27] : memref<2x4x256xf32, #tpu.memory_space<vmem>>, vector<1x4x256xf32>
    %55 = vector.shape_cast %54 : vector<1x4x256xf32> to vector<4x256xf32>
    %56 = vector.broadcast %33 : vector<4x1xf32> to vector<4x256xf32>
    %57 = arith.mulf %55, %56 : vector<4x256xf32>
    %58 = vector.broadcast %36 : vector<4x1xf32> to vector<4x256xf32>
    %59 = arith.addf %57, %58 : vector<4x256xf32>
    %cst_28 = arith.constant dense<0.000000e+00> : vector<8x256xf32>
    %60 = tpu.matmul %37, %59, %cst_28 {dimension_numbers = #tpu.dot_dimension_numbers<[1], [0], [0], [1], [0, 0, 1, 1], [], []>} : vector<8x4xf32>, vector<4x256xf32>, vector<8x256xf32> -> vector<8x256xf32>
    %61 = vector.broadcast %38 : vector<8x1xf32> to vector<8x256xf32>
    %62 = arith.addf %60, %61 : vector<8x256xf32>
    %63 = arith.index_cast %c1_i32_25 : i32 to index
    %c0_29 = arith.constant 0 : index
    %c0_30 = arith.constant 0 : index
    %64 = vector.load %arg6[%63, %c0_29, %c0_30] : memref<2x8x256xf32, #tpu.memory_space<vmem>>, vector<1x8x256xf32>
    %65 = vector.shape_cast %64 : vector<1x8x256xf32> to vector<8x256xf32>
    %66 = vector.shape_cast %62 : vector<8x256xf32> to vector<1x8x256xf32>
    tpu.vector_store %arg6[%63, %c0_29, %c0_30], %66 {strides = array<i32>} : memref<2x8x256xf32, #tpu.memory_space<vmem>>, vector<1x8x256xf32>,
    %c2_i32_31 = arith.constant 2 : i32
    return
  }
  func.func @transform_0(%arg0: i32) -> (i32, i32, i32) {
    %c0_i32 = arith.constant 0 : i32
    %c0_i32_0 = arith.constant 0 : i32
    %c0_i32_1 = arith.constant 0 : i32
    %c0_i32_2 = arith.constant 0 : i32
    return %c0_i32, %c0_i32_0, %c0_i32_1 : i32, i32, i32
  }
  func.func @transform_1(%arg0: i32) -> (i32, i32) {
    %c0_i32 = arith.constant 0 : i32
    %c0_i32_0 = arith.constant 0 : i32
    %c0_i32_1 = arith.constant 0 : i32
    return %c0_i32, %c0_i32_0 : i32, i32
  }
  func.func @transform_2(%arg0: i32) -> (i32, i32) {
    %c0_i32 = arith.constant 0 : i32
    %c0_i32_0 = arith.constant 0 : i32
    %c0_i32_1 = arith.constant 0 : i32
    return %c0_i32, %c0_i32_0 : i32, i32
  }
  func.func @transform_3(%arg0: i32) -> (i32, i32) {
    %c0_i32 = arith.constant 0 : i32
    %c0_i32_0 = arith.constant 0 : i32
    %c0_i32_1 = arith.constant 0 : i32
    return %c0_i32, %c0_i32_0 : i32, i32
  }
  func.func @transform_4(%arg0: i32) -> (i32, i32) {
    %c0_i32 = arith.constant 0 : i32
    %c0_i32_0 = arith.constant 0 : i32
    %c0_i32_1 = arith.constant 0 : i32
    return %c0_i32, %c0_i32_0 : i32, i32
  }
  func.func @transform_5(%arg0: i32) -> (i32, i32, i32) {
    %c0_i32 = arith.constant 0 : i32
    %c0_i32_0 = arith.constant 0 : i32
    %c0_i32_1 = arith.constant 0 : i32
    %c0_i32_2 = arith.constant 0 : i32
    return %c0_i32, %c0_i32_0, %c0_i32_1 : i32, i32, i32
  }
}

</mosaic_0001>

<llo_original>
// kernel: tpu_custom_call.1
$region0: #{tpu_custom_call.1}
  #allocation0 [shape = 'u32[]', space=smem, size = 0x4, offset = 0x4, fixed_abs, tag = 'smem constant byte address 0x4 - core index']
  #allocation1 [shape = 'u32[144,128]{1,0:T(1,128)}', space=vmem, size = 0x12000, scoped, tag = 'internal scratch']
  %s0 = inlined_call_operand.vmem [shape: f32[2,4,256], index: 0, kind: input, shape index: {}]
  %s1 = inlined_call_operand.vmem [shape: f32[4,1], index: 1, kind: input, shape index: {}]
  %s2 = inlined_call_operand.vmem [shape: f32[4,1], index: 2, kind: input, shape index: {}]
  %s3 = inlined_call_operand.vmem [shape: f32[8,4], index: 3, kind: input, shape index: {}]
  %s4 = inlined_call_operand.vmem [shape: f32[8,1], index: 4, kind: input, shape index: {}]
  %s5 = inlined_call_operand.hbm [shape: f32[2,8,256], index: 5, kind: output, shape index: {}]
  %s6 = sld [smem:[#allocation0]]
  $region30: #{tpu_custom_call.1} parent=0
    _
  %s8 = ssub.s32 1, %s6
  %s9 = scalar_select 0, %s8, %s6
  $region1: #{tpu_custom_call.1} parent=0
    #allocation2 [shape = 'u8[16384]{0}', space=vmem, size = 0x4000, scoped, tag = 'output window, operand 0, single buffered']
    #allocation3 [shape = 's32[1]{0}', space=sflag, size = 0x4, scoped, tag = 'scoped memory for tpu_custom_call.1']
    %10 = vsyncpa [#allocation3], 0
    // Predicated region
    $region2: #{tpu_custom_call.1} parent=1 // pred_check
      _
    $region3: #{tpu_custom_call.1} parent=1 // pred_check_branch
      %12 = sbr.rel (0) target = $region5
    $region4: #{tpu_custom_call.1} parent=1 // pred_region
      _
    $region5: #{tpu_custom_call.1} parent=1 // pred_fallthru
      _
    // Predicated region
    $region6: #{tpu_custom_call.1} parent=1 // pred_check
      _
    $region7: #{tpu_custom_call.1} parent=1 // pred_check_branch
      %14 = sbr.rel (0) target = $region9
    $region8: #{tpu_custom_call.1} parent=1 // pred_region
      _
    $region9: #{tpu_custom_call.1} parent=1 // pred_fallthru
      _
    // Predicated region
    $region10: #{tpu_custom_call.1} parent=1 // pred_check
      _
    $region11: #{tpu_custom_call.1} parent=1 // pred_check_branch
      %16 = sbr.rel (0) target = $region13
    $region12: #{tpu_custom_call.1} parent=1 // pred_region
      _
    $region13: #{tpu_custom_call.1} parent=1 // pred_fallthru
      _
    // Predicated region
    $region14: #{tpu_custom_call.1} parent=1 // pred_check
      _
    $region15: #{tpu_custom_call.1} parent=1 // pred_check_branch
      %18 = sbr.rel (0) target = $region17
    $region16: #{tpu_custom_call.1} parent=1 // pred_region
      _
    $region17: #{tpu_custom_call.1} parent=1 // pred_fallthru
      _
    // Predicated region
    $region18: #{tpu_custom_call.1} parent=1 // pred_check
      _
    $region19: #{tpu_custom_call.1} parent=1 // pred_check_branch
      %20 = sbr.rel (0) target = $region21
    $region20: #{tpu_custom_call.1} parent=1 // pred_region
      _
    $region21: #{tpu_custom_call.1} parent=1 // pred_fallthru
      _
    %v21 = vld [vmem:[%s0] sm:$0xff]
    %v23 = vcombine.high %v21, %v21
    %vm25 = vcmask 1043456
    %v26 = vsel %vm25, %v21, 0.0
    %v27 = vsel %vm25, %v23, 0.0
    %v28 = vadd.f32 %v26, %v27
    %29 = vadd.xlane.f32.xlu0 %v28
    %v30 = vpop.xlane.xlu0 %29
    %v31 = vadd.f32 %v30, 0.0
    %v32 = vmul.f32 %v21, %v21
    %v34 = vcombine.high %v32, %v32
    %v36 = vsel %vm25, %v32, 0.0
    %v37 = vsel %vm25, %v34, 0.0
    %v38 = vadd.f32 %v36, %v37
    %39 = vadd.xlane.f32.xlu0 %v38
    %v40 = vpop.xlane.xlu0 %39
    %v41 = vadd.f32 %v40, 0.0
    %s42 = scalar_lea.vmem %s0, 8
    %v43 = vld [vmem:[%s42] sm:$0xff]
    %v45 = vcombine.high %v43, %v43
    %v47 = vsel %vm25, %v43, 0.0
    %v48 = vsel %vm25, %v45, 0.0
    %v49 = vadd.f32 %v47, %v48
    %50 = vadd.xlane.f32.xlu0 %v49
    %v51 = vpop.xlane.xlu0 %50
    %v52 = vadd.f32 %v31, %v51
    %v53 = vmul.f32 %v43, %v43
    %v55 = vcombine.high %v53, %v53
    %v57 = vsel %vm25, %v53, 0.0
    %v58 = vsel %vm25, %v55, 0.0
    %v59 = vadd.f32 %v57, %v58
    %60 = vadd.xlane.f32.xlu0 %v59
    %v61 = vpop.xlane.xlu0 %60
    %v62 = vadd.f32 %v41, %v61
    %v63 = vmul.f32 %v52, 0.001953125
    %v64 = vmul.f32 %v62, 0.001953125
    %v65 = vmul.f32 %v63, %v63
    %v66 = vsub.f32 %v64, %v65
    %v67 = vmax.f32 %v66, 0.0
    %v68 = vadd.f32 %v67, 1e-05
    %v69 = vrsqrt.pop %v68
    %v70 = vld [vmem:[%s1] sm:$0xf]
    %v71 = vmul.f32 %v70, %v69
    %v72 = vld [vmem:[%s2] sm:$0xf]
    %v73 = vmul.f32 %v63, %v71
    %v74 = vsub.f32 %v72, %v73
    %v75 = vld [vmem:[%s3] sm:$0xff]
    %v76 = vld [vmem:[%s4] sm:$0xff]
    %78 = vset.pattern.permute.xlu0 0
    %79 = vperm.xlu0 %78, %v71
    %v80 = vpop.permute.xlu0 %79
    %v82 = vunpack.c.l.s4 839922192
    %v83 = vunpack.c.0.s8 %v82
    %v84 = vlaneseq
    %v85 = vshrl.u32 %v84, 7
    %v86 = vsub.s32 %v83, %v85
    %v87 = vrot.slane %v80, %v86
    %v89 = vmul.f32 %v21, %v87
    %91 = vset.pattern.permute.xlu0 0
    %92 = vperm.xlu0 %91, %v74
    %v93 = vpop.permute.xlu0 %92
    %v95 = vunpack.c.l.s4 839922192
    %v96 = vunpack.c.0.s8 %v95
    %v97 = vlaneseq
    %v98 = vshrl.u32 %v97, 7
    %v99 = vsub.s32 %v96, %v98
    %v100 = vrot.slane %v93, %v99
    %v102 = vadd.f32 %v89, %v100
    %104 = vset.pattern.permute.xlu0 0
    %105 = vperm.xlu0 %104, %v76
    %v106 = vpop.permute.xlu0 %105
    %v109 = vcombine.high %v102, %v102
    %vm110 = vcmask 31744
    %v112 = vsel %vm110, %v75, 0
    %v114 = vsel %vm25, %v102, 0
    %v116 = vsel %vm25, %v109, 0
    %118 = vmatprep.subr.mxu0 0.0
    %119 = vmatpush1.msra.mxu0 0.0
    %120 = vmatprep.subr.mxu0 0.0
    %121 = vmatpush1.msra.mxu0 0.0
    %122 = vmatprep.subr.mxu0 0.0
    %123 = vmatpush1.msra.mxu0 0.0
    %124 = vmatprep.subr.mxu0 0.0
    %125 = vmatpush1.msra.mxu0 0.0
    %126 = vmatprep.subr.mxu0 0.0
    %127 = vmatpush1.msra.mxu0 0.0
    %128 = vmatprep.subr.mxu0 0.0
    %129 = vmatpush1.msra.mxu0 0.0
    %130 = vmatprep.subr.mxu0 0.0
    %131 = vmatpush1.msra.mxu0 0.0
    %132 = vmatprep.subr.mxu0 0.0
    %133 = vmatpush1.msra.mxu0 0.0
    %134 = vmatprep.subr.mxu0 0.0
    %135 = vmatpush1.msra.mxu0 0.0
    %136 = vmatprep.subr.mxu0 0.0
    %137 = vmatpush1.msra.mxu0 0.0
    %138 = vmatprep.subr.mxu0 0.0
    %139 = vmatpush1.msra.mxu0 0.0
    %140 = vmatprep.subr.mxu0 0.0
    %141 = vmatpush1.msra.mxu0 0.0
    %142 = vmatprep.subr.mxu0 0.0
    %143 = vmatpush1.msra.mxu0 0.0
    %144 = vmatprep.subr.mxu0 0.0
    %145 = vmatpush1.msra.mxu0 0.0
    %146 = vmatprep.subr.mxu0 0.0
    %147 = vmatpush1.msra.mxu0 0.0
    %148 = vmatprep.subr.mxu0 %v116
    %149 = vmatpush1.msra.mxu0 %v114
    %150 = vmatprep.subr.mxu0 0.0
    %151 = vmatpush2.msra.mxu0 0.0
    %152 = vmatprep.subr.mxu0 0.0
    %153 = vmatpush2.msra.mxu0 0.0
    %154 = vmatprep.subr.mxu0 0.0
    %155 = vmatpush2.msra.mxu0 0.0
    %156 = vmatprep.subr.mxu0 0.0
    %157 = vmatpush2.msra.mxu0 0.0
    %158 = vmatprep.subr.mxu0 0.0
    %159 = vmatpush2.msra.mxu0 0.0
    %160 = vmatprep.subr.mxu0 0.0
    %161 = vmatpush2.msra.mxu0 0.0
    %162 = vmatprep.subr.mxu0 0.0
    %163 = vmatpush2.msra.mxu0 0.0
    %164 = vmatprep.subr.mxu0 0.0
    %165 = vmatpush2.msra.mxu0 0.0
    %166 = vmatprep.subr.mxu0 0.0
    %167 = vmatpush2.msra.mxu0 0.0
    %168 = vmatprep.subr.mxu0 0.0
    %169 = vmatpush2.msra.mxu0 0.0
    %170 = vmatprep.subr.mxu0 0.0
    %171 = vmatpush2.msra.mxu0 0.0
    %172 = vmatprep.subr.mxu0 0.0
    %173 = vmatpush2.msra.mxu0 0.0
    %174 = vmatprep.subr.mxu0 0.0
    %175 = vmatpush2.msra.mxu0 0.0
    %176 = vmatprep.subr.mxu0 0.0
    %177 = vmatpush2.msra.mxu0 0.0
    %178 = vmatprep.subr.mxu0 0.0
    %179 = vmatpush2.msra.mxu0 0.0
    %180 = vmatprep.subr.mxu0 0.0
    %181 = vmatpush2.msra.mxu0 0.0
    %182 = vmatprep.mubr.f32.mxu0 0.0
    %183 = vmatmul.mubr.f32.gmra.mxu0 %v112
    %v184 = vpop.f32.mrf.mxu0
    %v185 = vadd.f32 %v106, %v184
    %v186 = vpop.f32.mrf.mxu0
    %v187 = vadd.f32 %v106, %v186
    %188 = vdwg.mxu0
    %189 = vst [vmem:[#allocation2] sm:$0xff] %v185
    %190 = vst [vmem:[#allocation2 + $0x8] sm:$0xff] %v187
    %v191 = vld [vmem:[%s42] sm:$0xff]
    %v192 = vmul.f32 %v191, %v87
    %v193 = vadd.f32 %v192, %v100
    %v195 = vcombine.high %v193, %v193
    %v196 = vsel %vm25, %v193, 0
    %v198 = vsel %vm25, %v195, 0
    %200 = vmatprep.subr.mxu0 0.0
    %201 = vmatpush1.msra.mxu0 0.0
    %202 = vmatprep.subr.mxu0 0.0
    %203 = vmatpush1.msra.mxu0 0.0
    %204 = vmatprep.subr.mxu0 0.0
    %205 = vmatpush1.msra.mxu0 0.0
    %206 = vmatprep.subr.mxu0 0.0
    %207 = vmatpush1.msra.mxu0 0.0
    %208 = vmatprep.subr.mxu0 0.0
    %209 = vmatpush1.msra.mxu0 0.0
    %210 = vmatprep.subr.mxu0 0.0
    %211 = vmatpush1.msra.mxu0 0.0
    %212 = vmatprep.subr.mxu0 0.0
    %213 = vmatpush1.msra.mxu0 0.0
    %214 = vmatprep.subr.mxu0 0.0
    %215 = vmatpush1.msra.mxu0 0.0
    %216 = vmatprep.subr.mxu0 0.0
    %217 = vmatpush1.msra.mxu0 0.0
    %218 = vmatprep.subr.mxu0 0.0
    %219 = vmatpush1.msra.mxu0 0.0
    %220 = vmatprep.subr.mxu0 0.0
    %221 = vmatpush1.msra.mxu0 0.0
    %222 = vmatprep.subr.mxu0 0.0
    %223 = vmatpush1.msra.mxu0 0.0
    %224 = vmatprep.subr.mxu0 0.0
    %225 = vmatpush1.msra.mxu0 0.0
    %226 = vmatprep.subr.mxu0 0.0
    %227 = vmatpush1.msra.mxu0 0.0
    %228 = vmatprep.subr.mxu0 0.0
    %229 = vmatpush1.msra.mxu0 0.0
    %230 = vmatprep.subr.mxu0 %v198
    %231 = vmatpush1.msra.mxu0 %v196
    %232 = vmatprep.subr.mxu0 0.0
    %233 = vmatpush2.msra.mxu0 0.0
    %234 = vmatprep.subr.mxu0 0.0
    %235 = vmatpush2.msra.mxu0 0.0
    %236 = vmatprep.subr.mxu0 0.0
    %237 = vmatpush2.msra.mxu0 0.0
    %238 = vmatprep.subr.mxu0 0.0
    %239 = vmatpush2.msra.mxu0 0.0
    %240 = vmatprep.subr.mxu0 0.0
    %241 = vmatpush2.msra.mxu0 0.0
    %242 = vmatprep.subr.mxu0 0.0
    %243 = vmatpush2.msra.mxu0 0.0
    %244 = vmatprep.subr.mxu0 0.0
    %245 = vmatpush2.msra.mxu0 0.0
    %246 = vmatprep.subr.mxu0 0.0
    %247 = vmatpush2.msra.mxu0 0.0
    %248 = vmatprep.subr.mxu0 0.0
    %249 = vmatpush2.msra.mxu0 0.0
    %250 = vmatprep.subr.mxu0 0.0
    %251 = vmatpush2.msra.mxu0 0.0
    %252 = vmatprep.subr.mxu0 0.0
    %253 = vmatpush2.msra.mxu0 0.0
    %254 = vmatprep.subr.mxu0 0.0
    %255 = vmatpush2.msra.mxu0 0.0
    %256 = vmatprep.subr.mxu0 0.0
    %257 = vmatpush2.msra.mxu0 0.0
    %258 = vmatprep.subr.mxu0 0.0
    %259 = vmatpush2.msra.mxu0 0.0
    %260 = vmatprep.subr.mxu0 0.0
    %261 = vmatpush2.msra.mxu0 0.0
    %262 = vmatprep.subr.mxu0 0.0
    %263 = vmatpush2.msra.mxu0 0.0
    %264 = vmatprep.mubr.f32.mxu0 0.0
    %265 = vmatmul.mubr.f32.gmra.mxu0 %v112
    %v266 = vpop.f32.mrf.mxu0
    %v267 = vadd.f32 %v106, %v266
    %v268 = vpop.f32.mrf.mxu0
    %v269 = vadd.f32 %v106, %v268
    %270 = vdwg.mxu0
    %s271 = scalar_lea.vmem [#allocation2], 16
    %272 = vst [vmem:[%s271] sm:$0xff] %v267
    %273 = vst [vmem:[%s271 + $0x8] sm:$0xff] %v269
    // Predicated region
    $region22: #{tpu_custom_call.1} parent=1 // pred_check
      _
    $region23: #{tpu_custom_call.1} parent=1 // pred_check_branch
      %275 = sbr.rel (0) target = $region25
    $region24: #{tpu_custom_call.1} parent=1 // pred_region
      %s277 = ssub.s32 512, 512
      %278 = vsyncadd [#allocation3], %s277
      %s279 = sshll.u32 [#allocation2], 4
      %s280 = int_to_ptr.vmem [resolvable:$true] %s279
      %285 = dma.vmem_to_hbm [thread:$0]  %s280, 512, %s5, [#allocation3], 256, 256, 16
    $region25: #{tpu_custom_call.1} parent=1 // pred_fallthru
      _
    // Predicated region
    $region26: #{tpu_custom_call.1} parent=1 // pred_check
      _
    $region27: #{tpu_custom_call.1} parent=1 // pred_check_branch
      %287 = sbr.rel (0) target = $region29
    $region28: #{tpu_custom_call.1} parent=1 // pred_region
      %288 = dma.done [#allocation3], 512
    $region29: #{tpu_custom_call.1} parent=1 // pred_fallthru
      _
    %289 = vsyncpa [#allocation3], 1

</llo_original>
